<compile_context>
chip_gen: v7x
topology: tpu7x:2x2x1
jax: 0.10.0
libtpu: 0.0.40
codegen_flags: <defaults>
</compile_context>

<pallas_src>
from collections import OrderedDict

import jax
import jax.numpy as jnp
import numpy as np
from jax.experimental import pallas as pl
from jax.experimental.pallas import tpu as pltpu


# ----------------------------------------------------------------------------
# Fused Pallas kernel: embedding gather + MLP trunk + all hyper heads.
# ----------------------------------------------------------------------------
def _fused_hyper_kernel(idx_ref, emb_ref, w1_ref, b1_ref, w2_ref, b2_ref,
                        wb_ref, bb_ref, out_ref, emd_sc):
    # In-kernel embedding gather: idx lives in SMEM (scalar prefetch); the
    # table is (n_nodes, 1, E_pad) so the dynamic index is on an untiled
    # leading axis and each row is its own lane-dense (1, E_pad) tile.
    b_pad = emd_sc.shape[0]
    for r in range(b_pad):                      # static, tiny unrolled loop
        emd_sc[pl.ds(r, 1), :] = emb_ref[idx_ref[r]]

    # MLP trunk: Linear -> ReLU -> Linear (f32, tiny).
    h = jnp.dot(emd_sc[...], w1_ref[...],
                preferred_element_type=jnp.float32) + b1_ref[...]
    h = jnp.maximum(h, 0.0)
    f = jnp.dot(h, w2_ref[...],
                preferred_element_type=jnp.float32) + b2_ref[...]

    # All hyper heads concatenated on the lane axis.  bf16 weights on the MXU,
    # f32 accumulation, one wide unmasked (B_pad, T_pad) store.
    out_ref[...] = jnp.dot(f.astype(wb_ref.dtype), wb_ref[...],
                           preferred_element_type=jnp.float32) + bb_ref[...]


def run_fused(idx_pad, emb_k, w1t, b1, w2t, b2, w_big, b_big, *, b_pad):
    """idx_pad: (B_pad,) i32; emb_k: (n_nodes,1,E_pad); returns (B_pad,T_pad) f32."""
    n_nodes, _, e_pad = emb_k.shape
    hid = w1t.shape[1]
    t_pad = w_big.shape[1]

    flops = 2 * b_pad * (e_pad * hid + hid * hid + hid * t_pad)
    bytes_accessed = (idx_pad.size * 4 + emb_k.size * 4 + w1t.size * 4
                      + b1.size * 4 + w2t.size * 4 + b2.size * 4
                      + w_big.size * 2 + b_big.size * 4 + b_pad * t_pad * 4)

    grid_spec = pltpu.PrefetchScalarGridSpec(
        num_scalar_prefetch=1,
        grid=(1,),
        in_specs=[
            pl.BlockSpec((n_nodes, 1, e_pad), lambda i, idx: (0, 0, 0)),
            pl.BlockSpec((e_pad, hid),        lambda i, idx: (0, 0)),
            pl.BlockSpec((1, hid),            lambda i, idx: (0, 0)),
            pl.BlockSpec((hid, hid),          lambda i, idx: (0, 0)),
            pl.BlockSpec((1, hid),            lambda i, idx: (0, 0)),
            pl.BlockSpec((hid, t_pad),        lambda i, idx: (0, 0)),
            pl.BlockSpec((1, t_pad),          lambda i, idx: (0, 0)),
        ],
        out_specs=pl.BlockSpec((b_pad, t_pad), lambda i, idx: (0, 0)),
        scratch_shapes=[pltpu.VMEM((b_pad, e_pad), jnp.float32)],
    )
    return pl.pallas_call(
        _fused_hyper_kernel,
        out_shape=jax.ShapeDtypeStruct((b_pad, t_pad), jnp.float32),
        grid_spec=grid_spec,
        compiler_params=pltpu.CompilerParams(
            dimension_semantics=("arbitrary",)),
        cost_estimate=pl.CostEstimate(flops=flops, transcendentals=0,
                                      bytes_accessed=bytes_accessed),
    )(idx_pad, emb_k, w1t, b1, w2t, b2, w_big, b_big)


# ----------------------------------------------------------------------------
# Parameter construction (deterministic, PyTorch-shape-faithful)
# ----------------------------------------------------------------------------
def head_specs(feat, inner_dim, dim, depth):
    specs = [
        ("embed_weight", feat * inner_dim),
        ("embed_bias", inner_dim),
        ("encoder_weight", inner_dim),
        ("encoder_bias", inner_dim),
        ("projection_weight", feat * inner_dim),
        ("projection_bias", feat),
    ]
    for d in range(depth):
        specs += [
            (f"qkv_value_{d}", dim * inner_dim),
            (f"qkv_bias_{d}", inner_dim),
            (f"key_weight_{d}", dim * inner_dim),
            (f"key_bias_{d}", inner_dim),
            (f"value_weight_{d}", dim * inner_dim),
            (f"value_bias_{d}", inner_dim),
            (f"out_weight_{d}", dim * inner_dim),
            (f"out_bias_{d}", inner_dim),
            (f"conv1_weight_{d}", dim * inner_dim),
            (f"conv1_bias_{d}", inner_dim),
            (f"conv2_weight_{d}", dim * inner_dim),
            (f"conv2_bias_{d}", inner_dim),
            (f"norm1_weight_{d}", inner_dim),
            (f"norm1_bias_{d}", inner_dim),
            (f"norm2_weight_{d}", inner_dim),
            (f"norm2_bias_{d}", inner_dim),
        ]
    return specs


def init_params(key, cfg):
    n_nodes = cfg["n_nodes"]
    E = cfg["embedding_dim"]
    H = cfg["hidden_dim"]
    E_pad = pl.cdiv(E, 128) * 128                 # lane-dense trunk K dim
    specs = head_specs(cfg["feat"], cfg["inner_dim"], cfg["dim"], cfg["depth"])

    keys = jax.random.split(key, 5 + 2 * len(specs))
    p = {}
    # Embedding table, zero-padded on the feature axis and laid out
    # (n_nodes, 1, E_pad) so the in-kernel gather indexes an untiled axis.
    emb = jax.random.normal(keys[0], (n_nodes, E), jnp.float32) * 0.1
    emb = jnp.pad(emb, ((0, 0), (0, E_pad - E)))
    p["emb_table"] = emb.reshape(n_nodes, 1, E_pad)

    # MLP (stored pre-transposed: y = x @ Wt + b, equiv. to PyTorch x @ W.T + b).
    # w1t rows beyond E are zero, so the E-padding is numerically exact.
    w1 = jax.random.normal(keys[1], (E, H), jnp.float32) * 0.1
    p["w1t"] = jnp.pad(w1, ((0, E_pad - E), (0, 0)))              # (E_pad, H)
    p["b1"] = (jax.random.normal(keys[2], (H,), jnp.float32) * 0.1).reshape(1, H)
    p["w2t"] = jax.random.normal(keys[3], (H, H), jnp.float32) * 0.1
    p["b2"] = (jax.random.normal(keys[4], (H,), jnp.float32) * 0.1).reshape(1, H)

    # Hyper heads: concatenate all Linear(hidden -> out_d) along the output
    # axis, pad ONCE to a lane-dense multiple of 256 columns, store bf16.
    w_cols, b_cols, offsets = [], [], {}
    start = 0
    for i, (name, out_d) in enumerate(specs):
        w = jax.random.normal(keys[5 + 2 * i], (H, out_d), jnp.float32) * 0.1
        b = jax.random.normal(keys[6 + 2 * i], (out_d,), jnp.float32) * 0.1
        w_cols.append(w)
        b_cols.append(b)
        offsets[name] = (start, out_d)
        start += out_d
    T_total = start
    T_pad = pl.cdiv(T_total, 256) * 256           # full 2x256 MXU column tiles
    w_big = jnp.concatenate(w_cols, axis=1)                       # (H, T_total)
    b_big = jnp.concatenate(b_cols, axis=0)                       # (T_total,)
    p["w_big"] = jnp.pad(w_big, ((0, 0), (0, T_pad - T_total))
                         ).astype(jnp.bfloat16)                   # (H, T_pad) bf16
    p["b_big"] = jnp.pad(b_big, ((0, T_pad - T_total),)).reshape(1, T_pad)

    meta = {"offsets": offsets, "T_total": T_total, "T_pad": T_pad,
            "E_pad": E_pad}
    return p, meta


# ----------------------------------------------------------------------------
# Forward (mirrors ViTHyper.forward, test == False branch).
# Device side = one jitted pallas_call returning a single slab; all per-head
# slicing and per-client OrderedDict packaging is host-side numpy (one
# device->host transfer, zero per-leaf device dispatches).
# ----------------------------------------------------------------------------
def make_forward(cfg, meta):
    feat = cfg["feat"]
    inner = cfg["inner_dim"]
    dim = cfg["dim"]
    depth = cfg["depth"]
    cs = cfg["client_sample"]
    offsets = meta["offsets"]
    T_total = meta["T_total"]
    B_pad = max(8, pl.cdiv(cs, 8) * 8)            # full sublanes for the kernel
    # The PyTorch module's .view(-1, dim) bias indexing is only consistent
    # when inner_dim == dim (same implicit requirement as the original code).
    assert inner == dim, "inner_dim must equal dim for per-client bias views"

    @jax.jit
    def device_fwd(params, idx_pad):
        return run_fused(idx_pad, params["emb_table"], params["w1t"],
                         params["b1"], params["w2t"], params["b2"],
                         params["w_big"], params["b_big"], b_pad=B_pad)

    def fwd(params, idx):
        idx = np.asarray(idx, dtype=np.int32)
        B = idx.shape[0]
        assert B == cs
        idx_pad = np.zeros((B_pad,), dtype=np.int32)
        idx_pad[:B] = idx                                   # host-side pad, free

        big_pad = jax.block_until_ready(device_fwd(params, jnp.asarray(idx_pad)))
        big = np.asarray(jax.device_get(big_pad))[:B, :T_total]   # one transfer

        outs = {name: big[:, s:s + n] for name, (s, n) in offsets.items()}

        embed_w = outs["embed_weight"].reshape(B, inner, feat)
        embed_b = outs["embed_bias"].reshape(B, inner)
        enc_w = outs["encoder_weight"].reshape(B, inner)
        enc_b = outs["encoder_bias"].reshape(B, inner)
        proj_w = outs["projection_weight"].reshape(B, feat, inner)
        proj_b = outs["projection_bias"].reshape(B, feat)

        weights = [OrderedDict() for _ in range(cs)]
        # Insertion order mirrors the PyTorch forward: embed entries first,
        # then per-depth attention/conv/norm entries, then the final four.
        for c in range(cs):
            weights[c]["enc_embedding.value_embedding.weight"] = embed_w[c]
            weights[c]["enc_embedding.value_embedding.bias"] = embed_b[c]

        for d in range(depth):
            qkv_w = outs[f"qkv_value_{d}"].reshape(B, inner, dim)
            qkv_b = outs[f"qkv_bias_{d}"].reshape(-1, dim)
            key_w = outs[f"key_weight_{d}"].reshape(B, inner, dim)
            key_b = outs[f"key_bias_{d}"].reshape(-1, dim)
            val_w = outs[f"value_weight_{d}"].reshape(B, inner, dim)
            val_b = outs[f"value_bias_{d}"].reshape(-1, dim)
            out_w = outs[f"out_weight_{d}"].reshape(B, inner, dim)
            out_b = outs[f"out_bias_{d}"].reshape(-1, dim)
            conv1_w = outs[f"conv1_weight_{d}"].reshape(B, inner, dim, 1)
            conv1_b = outs[f"conv1_bias_{d}"].reshape(-1, dim)
            conv2_w = outs[f"conv2_weight_{d}"].reshape(B, inner, dim, 1)
            conv2_b = outs[f"conv2_bias_{d}"].reshape(-1, dim)
            norm1_w = outs[f"norm1_weight_{d}"].reshape(-1, dim)
            norm1_b = outs[f"norm1_bias_{d}"].reshape(-1, dim)
            norm2_w = outs[f"norm2_weight_{d}"].reshape(-1, dim)
            norm2_b = outs[f"norm2_bias_{d}"].reshape(-1, dim)

            pre = f"encoder.attn_layers.{d}."
            for c in range(cs):
                w = weights[c]
                w[pre + "attention.query_projection.weight"] = qkv_w[c]
                w[pre + "attention.query_projection.bias"] = qkv_b[c]
                w[pre + "attention.key_projection.weight"] = key_w[c]
                w[pre + "attention.key_projection.bias"] = key_b[c]
                w[pre + "attention.value_projection.weight"] = val_w[c]
                w[pre + "attention.value_projection.bias"] = val_b[c]
                w[pre + "attention.out_projection.weight"] = out_w[c]
                w[pre + "attention.out_projection.bias"] = out_b[c]
                w[pre + "conv1.weight"] = conv1_w[c]
                w[pre + "conv1.bias"] = conv1_b[c]
                w[pre + "conv2.weight"] = conv2_w[c]
                w[pre + "conv2.bias"] = conv2_b[c]
                w[pre + "norm1.weight"] = norm1_w[c]
                w[pre + "norm1.bias"] = norm1_b[c]
                w[pre + "norm2.weight"] = norm2_w[c]
                w[pre + "norm2.bias"] = norm2_b[c]

        for c in range(cs):
            weights[c]["encoder.norm.weight"] = enc_w[c]
            weights[c]["encoder.norm.bias"] = enc_b[c]
            weights[c]["projection.weight"] = proj_w[c]
            weights[c]["projection.bias"] = proj_b[c]
        return weights

    return fwd


# TODO(synk): test==True branch (single-client .view(inner_dim, dim) reshapes)
# not implemented; only the test==False path is exercised here.


# ----------------------------------------------------------------------------
# Main
# ----------------------------------------------------------------------------
if __name__ == "__main__":
    cfg = dict(
        n_nodes=4,
        embedding_dim=32,
        feat=4,
        hidden_dim=32,
        dim=8,               # note: dim == inner_dim so the PyTorch .view(-1, dim)
        client_sample=3,     #       per-client indexing is shape-consistent.
        heads=2,
        dim_head=4,
        depth=2,
    )
    cfg["inner_dim"] = cfg["heads"] * cfg["dim_head"]
    assert cfg["inner_dim"] == cfg["dim"]

    key = jax.random.PRNGKey(0)
    params, meta = init_params(key, cfg)

    # One embedding index per sampled client (batch == client_sample).
    idx = jnp.array([0, 2, 3], dtype=jnp.int32)

    fwd = make_forward(cfg, meta)
    weights = fwd(params, idx)

    # Numeric check against a pure-JAX reference of the whole hot path
    # (same bf16 head weights, f32 accumulation).
    T = meta["T_total"]
    emb2d = params["emb_table"][:, 0, :]
    emd = emb2d[np.asarray(idx)]
    feat_ref = (jnp.maximum(emd @ params["w1t"] + params["b1"][0], 0.0)
                @ params["w2t"] + params["b2"][0])
    big_ref = (jnp.dot(feat_ref.astype(jnp.bfloat16), params["w_big"][:, :T],
                       preferred_element_type=jnp.float32)
               + params["b_big"][0, :T])
    big_ref = np.asarray(big_ref)

    s, n = meta["offsets"]["qkv_value_0"]
    ref_qkv = big_ref[:, s:s + n].reshape(-1, cfg["inner_dim"], cfg["dim"])
    got_qkv = np.stack(
        [w["encoder.attn_layers.0.attention.query_projection.weight"]
         for w in weights])
    np.testing.assert_allclose(got_qkv, ref_qkv, rtol=1e-2, atol=1e-2)

    s, n = meta["offsets"]["conv1_weight_1"]
    ref_c1 = big_ref[:, s:s + n].reshape(-1, cfg["inner_dim"], cfg["dim"], 1)
    got_c1 = np.stack([w["encoder.attn_layers.1.conv1.weight"] for w in weights])
    np.testing.assert_allclose(got_c1, ref_c1, rtol=1e-2, atol=1e-2)

    s, n = meta["offsets"]["projection_bias"]
    ref_pb = big_ref[:, s:s + n].reshape(-1, cfg["feat"])
    got_pb = np.stack([w["projection.bias"] for w in weights])
    np.testing.assert_allclose(got_pb, ref_pb, rtol=1e-2, atol=1e-2)

    assert weights[0]["projection.weight"].shape == (cfg["feat"], cfg["inner_dim"])
    assert weights[0]["encoder.attn_layers.0.conv2.weight"].shape == (
        cfg["inner_dim"], cfg["dim"], 1)
    assert list(weights[0].keys())[0] == "enc_embedding.value_embedding.weight"
    assert list(weights[0].keys())[-1] == "projection.bias"

    print("KERNEL_OK")
</pallas_src>

<mosaic_0001>
module attributes {stable_mosaic.version = 11 : i64} {
  func.func @_fused_hyper_kernel(%arg0: i32, %arg1: memref<8xi32, #tpu.memory_space<smem>>, %arg2: memref<4x1x128xf32, #tpu.memory_space<vmem>>, %arg3: memref<128x32xf32, #tpu.memory_space<vmem>>, %arg4: memref<1x32xf32, #tpu.memory_space<vmem>>, %arg5: memref<32x32xf32, #tpu.memory_space<vmem>>, %arg6: memref<1x32xf32, #tpu.memory_space<vmem>>, %arg7: memref<32x1024xbf16, #tpu.memory_space<vmem>>, %arg8: memref<1x1024xf32, #tpu.memory_space<vmem>>, %arg9: memref<8x1024xf32, #tpu.memory_space<vmem>>, %arg10: memref<8x128xf32, #tpu.memory_space<vmem>>) attributes {dimension_semantics = [#tpu.dimension_semantics<arbitrary>], iteration_bounds = array<i64: 1>, scalar_prefetch = 1 : i64, scratch_operands = 1 : i64, tpu.core_type = #tpu.core_type<tc>, window_params = [{pipeline_mode = #tpu.pipeline_mode<synchronous>, transform_indices = @transform_0, window_bounds = array<i64: 4, 1, 128>}, {pipeline_mode = #tpu.pipeline_mode<synchronous>, transform_indices = @transform_1, window_bounds = array<i64: 128, 32>}, {pipeline_mode = #tpu.pipeline_mode<synchronous>, transform_indices = @transform_2, window_bounds = array<i64: 1, 32>}, {pipeline_mode = #tpu.pipeline_mode<synchronous>, transform_indices = @transform_3, window_bounds = array<i64: 32, 32>}, {pipeline_mode = #tpu.pipeline_mode<synchronous>, transform_indices = @transform_4, window_bounds = array<i64: 1, 32>}, {pipeline_mode = #tpu.pipeline_mode<synchronous>, transform_indices = @transform_5, window_bounds = array<i64: 32, 1024>}, {pipeline_mode = #tpu.pipeline_mode<synchronous>, transform_indices = @transform_6, window_bounds = array<i64: 1, 1024>}, {pipeline_mode = #tpu.pipeline_mode<synchronous>, transform_indices = @transform_7, window_bounds = array<i64: 8, 1024>}]} {
    %c0 = arith.constant 0 : index
    %0 = memref.load %arg1[%c0] : memref<8xi32, #tpu.memory_space<smem>>
    %1 = arith.index_cast %0 : i32 to index
    %c0_0 = arith.constant 0 : index
    %c0_1 = arith.constant 0 : index
    %2 = vector.load %arg2[%1, %c0_0, %c0_1] : memref<4x1x128xf32, #tpu.memory_space<vmem>>, vector<1x1x128xf32>
    %3 = vector.shape_cast %2 : vector<1x1x128xf32> to vector<1x128xf32>
    %c0_2 = arith.constant 0 : index
    %c0_3 = arith.constant 0 : index
    %4 = vector.load %arg10[%c0_2, %c0_3] : memref<8x128xf32, #tpu.memory_space<vmem>>, vector<1x128xf32>
    tpu.vector_store %arg10[%c0_2, %c0_3], %3 {strides = array<i32>} : memref<8x128xf32, #tpu.memory_space<vmem>>, vector<1x128xf32>,
    %c1 = arith.constant 1 : index
    %5 = memref.load %arg1[%c1] : memref<8xi32, #tpu.memory_space<smem>>
    %6 = arith.index_cast %5 : i32 to index
    %c0_4 = arith.constant 0 : index
    %c0_5 = arith.constant 0 : index
    %7 = vector.load %arg2[%6, %c0_4, %c0_5] : memref<4x1x128xf32, #tpu.memory_space<vmem>>, vector<1x1x128xf32>
    %8 = vector.shape_cast %7 : vector<1x1x128xf32> to vector<1x128xf32>
    %c1_6 = arith.constant 1 : index
    %c0_7 = arith.constant 0 : index
    %9 = vector.load %arg10[%c1_6, %c0_7] : memref<8x128xf32, #tpu.memory_space<vmem>>, vector<1x128xf32>
    tpu.vector_store %arg10[%c1_6, %c0_7], %8 {strides = array<i32>} : memref<8x128xf32, #tpu.memory_space<vmem>>, vector<1x128xf32>,
    %c2 = arith.constant 2 : index
    %10 = memref.load %arg1[%c2] : memref<8xi32, #tpu.memory_space<smem>>
    %11 = arith.index_cast %10 : i32 to index
    %c0_8 = arith.constant 0 : index
    %c0_9 = arith.constant 0 : index
    %12 = vector.load %arg2[%11, %c0_8, %c0_9] : memref<4x1x128xf32, #tpu.memory_space<vmem>>, vector<1x1x128xf32>
    %13 = vector.shape_cast %12 : vector<1x1x128xf32> to vector<1x128xf32>
    %c2_10 = arith.constant 2 : index
    %c0_11 = arith.constant 0 : index
    %14 = vector.load %arg10[%c2_10, %c0_11] : memref<8x128xf32, #tpu.memory_space<vmem>>, vector<1x128xf32>
    tpu.vector_store %arg10[%c2_10, %c0_11], %13 {strides = array<i32>} : memref<8x128xf32, #tpu.memory_space<vmem>>, vector<1x128xf32>,
    %c3 = arith.constant 3 : index
    %15 = memref.load %arg1[%c3] : memref<8xi32, #tpu.memory_space<smem>>
    %16 = arith.index_cast %15 : i32 to index
    %c0_12 = arith.constant 0 : index
    %c0_13 = arith.constant 0 : index
    %17 = vector.load %arg2[%16, %c0_12, %c0_13] : memref<4x1x128xf32, #tpu.memory_space<vmem>>, vector<1x1x128xf32>
    %18 = vector.shape_cast %17 : vector<1x1x128xf32> to vector<1x128xf32>
    %c3_14 = arith.constant 3 : index
    %c0_15 = arith.constant 0 : index
    %19 = vector.load %arg10[%c3_14, %c0_15] : memref<8x128xf32, #tpu.memory_space<vmem>>, vector<1x128xf32>
    tpu.vector_store %arg10[%c3_14, %c0_15], %18 {strides = array<i32>} : memref<8x128xf32, #tpu.memory_space<vmem>>, vector<1x128xf32>,
    %c4 = arith.constant 4 : index
    %20 = memref.load %arg1[%c4] : memref<8xi32, #tpu.memory_space<smem>>
    %21 = arith.index_cast %20 : i32 to index
    %c0_16 = arith.constant 0 : index
    %c0_17 = arith.constant 0 : index
    %22 = vector.load %arg2[%21, %c0_16, %c0_17] : memref<4x1x128xf32, #tpu.memory_space<vmem>>, vector<1x1x128xf32>
    %23 = vector.shape_cast %22 : vector<1x1x128xf32> to vector<1x128xf32>
    %c4_18 = arith.constant 4 : index
    %c0_19 = arith.constant 0 : index
    %24 = vector.load %arg10[%c4_18, %c0_19] : memref<8x128xf32, #tpu.memory_space<vmem>>, vector<1x128xf32>
    tpu.vector_store %arg10[%c4_18, %c0_19], %23 {strides = array<i32>} : memref<8x128xf32, #tpu.memory_space<vmem>>, vector<1x128xf32>,
    %c5 = arith.constant 5 : index
    %25 = memref.load %arg1[%c5] : memref<8xi32, #tpu.memory_space<smem>>
    %26 = arith.index_cast %25 : i32 to index
    %c0_20 = arith.constant 0 : index
    %c0_21 = arith.constant 0 : index
    %27 = vector.load %arg2[%26, %c0_20, %c0_21] : memref<4x1x128xf32, #tpu.memory_space<vmem>>, vector<1x1x128xf32>
    %28 = vector.shape_cast %27 : vector<1x1x128xf32> to vector<1x128xf32>
    %c5_22 = arith.constant 5 : index
    %c0_23 = arith.constant 0 : index
    %29 = vector.load %arg10[%c5_22, %c0_23] : memref<8x128xf32, #tpu.memory_space<vmem>>, vector<1x128xf32>
    tpu.vector_store %arg10[%c5_22, %c0_23], %28 {strides = array<i32>} : memref<8x128xf32, #tpu.memory_space<vmem>>, vector<1x128xf32>,
    %c6 = arith.constant 6 : index
    %30 = memref.load %arg1[%c6] : memref<8xi32, #tpu.memory_space<smem>>
    %31 = arith.index_cast %30 : i32 to index
    %c0_24 = arith.constant 0 : index
    %c0_25 = arith.constant 0 : index
    %32 = vector.load %arg2[%31, %c0_24, %c0_25] : memref<4x1x128xf32, #tpu.memory_space<vmem>>, vector<1x1x128xf32>
    %33 = vector.shape_cast %32 : vector<1x1x128xf32> to vector<1x128xf32>
    %c6_26 = arith.constant 6 : index
    %c0_27 = arith.constant 0 : index
    %34 = vector.load %arg10[%c6_26, %c0_27] : memref<8x128xf32, #tpu.memory_space<vmem>>, vector<1x128xf32>
    tpu.vector_store %arg10[%c6_26, %c0_27], %33 {strides = array<i32>} : memref<8x128xf32, #tpu.memory_space<vmem>>, vector<1x128xf32>,
    %c7 = arith.constant 7 : index
    %35 = memref.load %arg1[%c7] : memref<8xi32, #tpu.memory_space<smem>>
    %36 = arith.index_cast %35 : i32 to index
    %c0_28 = arith.constant 0 : index
    %c0_29 = arith.constant 0 : index
    %37 = vector.load %arg2[%36, %c0_28, %c0_29] : memref<4x1x128xf32, #tpu.memory_space<vmem>>, vector<1x1x128xf32>
    %38 = vector.shape_cast %37 : vector<1x1x128xf32> to vector<1x128xf32>
    %c7_30 = arith.constant 7 : index
    %c0_31 = arith.constant 0 : index
    %39 = vector.load %arg10[%c7_30, %c0_31] : memref<8x128xf32, #tpu.memory_space<vmem>>, vector<1x128xf32>
    tpu.vector_store %arg10[%c7_30, %c0_31], %38 {strides = array<i32>} : memref<8x128xf32, #tpu.memory_space<vmem>>, vector<1x128xf32>,
    %c0_32 = arith.constant 0 : index
    %c0_33 = arith.constant 0 : index
    %40 = vector.load %arg10[%c0_32, %c0_33] : memref<8x128xf32, #tpu.memory_space<vmem>>, vector<8x128xf32>
    %c0_34 = arith.constant 0 : index
    %c0_35 = arith.constant 0 : index
    %41 = vector.load %arg3[%c0_34, %c0_35] : memref<128x32xf32, #tpu.memory_space<vmem>>, vector<128x32xf32>
    %cst = arith.constant dense<0.000000e+00> : vector<8x32xf32>
    %42 = tpu.matmul %40, %41, %cst {dimension_numbers = #tpu.dot_dimension_numbers<[1], [0], [0], [1], [0, 0, 1, 1], [], []>} : vector<8x128xf32>, vector<128x32xf32>, vector<8x32xf32> -> vector<8x32xf32>
    %c0_36 = arith.constant 0 : index
    %c0_37 = arith.constant 0 : index
    %43 = vector.load %arg4[%c0_36, %c0_37] : memref<1x32xf32, #tpu.memory_space<vmem>>, vector<1x32xf32>
    %44 = vector.broadcast %43 : vector<1x32xf32> to vector<8x32xf32>
    %45 = arith.addf %42, %44 : vector<8x32xf32>
    %cst_38 = arith.constant 0.000000e+00 : f32
    %46 = vector.broadcast %cst_38 : f32 to vector<8x32xf32>
    %47 = arith.maximumf %45, %46 : vector<8x32xf32>
    %c0_39 = arith.constant 0 : index
    %c0_40 = arith.constant 0 : index
    %48 = vector.load %arg5[%c0_39, %c0_40] : memref<32x32xf32, #tpu.memory_space<vmem>>, vector<32x32xf32>
    %cst_41 = arith.constant dense<0.000000e+00> : vector<8x32xf32>
    %49 = tpu.matmul %47, %48, %cst_41 {dimension_numbers = #tpu.dot_dimension_numbers<[1], [0], [0], [1], [0, 0, 1, 1], [], []>} : vector<8x32xf32>, vector<32x32xf32>, vector<8x32xf32> -> vector<8x32xf32>
    %c0_42 = arith.constant 0 : index
    %c0_43 = arith.constant 0 : index
    %50 = vector.load %arg6[%c0_42, %c0_43] : memref<1x32xf32, #tpu.memory_space<vmem>>, vector<1x32xf32>
    %51 = vector.broadcast %50 : vector<1x32xf32> to vector<8x32xf32>
    %52 = arith.addf %49, %51 : vector<8x32xf32>
    %53 = arith.truncf %52 : vector<8x32xf32> to vector<8x32xbf16>
    %c0_44 = arith.constant 0 : index
    %c0_45 = arith.constant 0 : index
    %54 = vector.load %arg7[%c0_44, %c0_45] : memref<32x1024xbf16, #tpu.memory_space<vmem>>, vector<32x1024xbf16>
    %cst_46 = arith.constant dense<0.000000e+00> : vector<8x1024xf32>
    %55 = tpu.matmul %53, %54, %cst_46 {dimension_numbers = #tpu.dot_dimension_numbers<[1], [0], [0], [1], [0, 0, 1, 1], [], []>} : vector<8x32xbf16>, vector<32x1024xbf16>, vector<8x1024xf32> -> vector<8x1024xf32>
    %c0_47 = arith.constant 0 : index
    %c0_48 = arith.constant 0 : index
    %56 = vector.load %arg8[%c0_47, %c0_48] : memref<1x1024xf32, #tpu.memory_space<vmem>>, vector<1x1024xf32>
    %57 = vector.broadcast %56 : vector<1x1024xf32> to vector<8x1024xf32>
    %58 = arith.addf %55, %57 : vector<8x1024xf32>
    %c0_49 = arith.constant 0 : index
    %c0_50 = arith.constant 0 : index
    %59 = vector.load %arg9[%c0_49, %c0_50] : memref<8x1024xf32, #tpu.memory_space<vmem>>, vector<8x1024xf32>
    tpu.vector_store %arg9[%c0_49, %c0_50], %58 {strides = array<i32>} : memref<8x1024xf32, #tpu.memory_space<vmem>>, vector<8x1024xf32>,
    return
  }
  func.func @transform_0(%arg0: i32, %arg1: memref<8xi32, #tpu.memory_space<smem>>) -> (i32, i32, i32) {
    %c0_i32 = arith.constant 0 : i32
    %c0_i32_0 = arith.constant 0 : i32
    %c0_i32_1 = arith.constant 0 : i32
    %c0_i32_2 = arith.constant 0 : i32
    return %c0_i32, %c0_i32_0, %c0_i32_1 : i32, i32, i32
  }
  func.func @transform_1(%arg0: i32, %arg1: memref<8xi32, #tpu.memory_space<smem>>) -> (i32, i32) {
    %c0_i32 = arith.constant 0 : i32
    %c0_i32_0 = arith.constant 0 : i32
    %c0_i32_1 = arith.constant 0 : i32
    return %c0_i32, %c0_i32_0 : i32, i32
  }
  func.func @transform_2(%arg0: i32, %arg1: memref<8xi32, #tpu.memory_space<smem>>) -> (i32, i32) {
    %c0_i32 = arith.constant 0 : i32
    %c0_i32_0 = arith.constant 0 : i32
    %c0_i32_1 = arith.constant 0 : i32
    return %c0_i32, %c0_i32_0 : i32, i32
  }
  func.func @transform_3(%arg0: i32, %arg1: memref<8xi32, #tpu.memory_space<smem>>) -> (i32, i32) {
    %c0_i32 = arith.constant 0 : i32
    %c0_i32_0 = arith.constant 0 : i32
    %c0_i32_1 = arith.constant 0 : i32
    return %c0_i32, %c0_i32_0 : i32, i32
  }
  func.func @transform_4(%arg0: i32, %arg1: memref<8xi32, #tpu.memory_space<smem>>) -> (i32, i32) {
    %c0_i32 = arith.constant 0 : i32
    %c0_i32_0 = arith.constant 0 : i32
    %c0_i32_1 = arith.constant 0 : i32
    return %c0_i32, %c0_i32_0 : i32, i32
  }
  func.func @transform_5(%arg0: i32, %arg1: memref<8xi32, #tpu.memory_space<smem>>) -> (i32, i32) {
    %c0_i32 = arith.constant 0 : i32
    %c0_i32_0 = arith.constant 0 : i32
    %c0_i32_1 = arith.constant 0 : i32
    return %c0_i32, %c0_i32_0 : i32, i32
  }
  func.func @transform_6(%arg0: i32, %arg1: memref<8xi32, #tpu.memory_space<smem>>) -> (i32, i32) {
    %c0_i32 = arith.constant 0 : i32
    %c0_i32_0 = arith.constant 0 : i32
    %c0_i32_1 = arith.constant 0 : i32
    return %c0_i32, %c0_i32_0 : i32, i32
  }
  func.func @transform_7(%arg0: i32, %arg1: memref<8xi32, #tpu.memory_space<smem>>) -> (i32, i32) {
    %c0_i32 = arith.constant 0 : i32
    %c0_i32_0 = arith.constant 0 : i32
    %c0_i32_1 = arith.constant 0 : i32
    return %c0_i32, %c0_i32_0 : i32, i32
  }
}

</mosaic_0001>

<llo_original>
// kernel: device_fwd.1
$region0: #{device_fwd.1}
  #allocation0 [shape = 'u32[]', space=smem, size = 0x4, offset = 0x4, fixed_abs, tag = 'smem constant byte address 0x4 - core index']
  #allocation1 [shape = 'u32[144,128]{1,0:T(1,128)}', space=vmem, size = 0x12000, scoped, tag = 'internal scratch']
  #allocation2 [shape = 'f32[8,128]{1,0:T(8,128)}', space=vmem, size = 0x1000, scoped, tag = 'scratch operand']
  #allocation3 [shape = 's32[1]{0}', space=sflag, size = 0x4, scoped, tag = 'scoped memory for device_fwd.1']
  #allocation4 [shape = 'u8[512]{0}', space=smem, size = 0x200, scoped, tag = 'prefetched SMEM operand 0']
  %s0 = inlined_call_operand.vmem [shape: s32[8], index: 0, kind: input, shape index: {}]
  %s1 = inlined_call_operand.vmem [shape: f32[4,1,128], index: 1, kind: input, shape index: {}]
  %s2 = inlined_call_operand.vmem [shape: f32[128,32], index: 2, kind: input, shape index: {}]
  %s3 = inlined_call_operand.vmem [shape: f32[1,32], index: 3, kind: input, shape index: {}]
  %s4 = inlined_call_operand.vmem [shape: f32[32,32], index: 4, kind: input, shape index: {}]
  %s5 = inlined_call_operand.vmem [shape: f32[1,32], index: 5, kind: input, shape index: {}]
  %s6 = inlined_call_operand.vmem [shape: bf16[32,1024], index: 6, kind: input, shape index: {}]
  %s7 = inlined_call_operand.vmem [shape: f32[1,1024], index: 7, kind: input, shape index: {}]
  %s8 = inlined_call_operand.hbm [shape: f32[8,1024], index: 8, kind: output, shape index: {}]
  %s9 = sld [smem:[#allocation0]]
  $region38: #{device_fwd.1} parent=0
    _
  %s11 = ssub.s32 1, %s9
  %s12 = scalar_select 0, %s11, %s9
  %s13 = sshll.u32 %s0, 4
  %s14 = int_to_ptr.vmem [resolvable:$true] %s13
  %16 = dma.vmem_to_smem %s14, 16, [#allocation4], [#allocation3]
  %17 = dma.done [#allocation3], 16
  %18 = sfence
  $region1: #{device_fwd.1} parent=0
    #allocation5 [shape = 'u8[32768]{0}', space=vmem, size = 0x8000, scoped, tag = 'output window, operand 0, single buffered']
    #allocation6 [shape = 's32[1]{0}', space=sflag, size = 0x4, scoped, tag = 'scoped memory for device_fwd.1']
    %19 = vsyncpa [#allocation6], 0
    // Predicated region
    $region2: #{device_fwd.1} parent=1 // pred_check
      _
    $region3: #{device_fwd.1} parent=1 // pred_check_branch
      %21 = sbr.rel (0) target = $region5
    $region4: #{device_fwd.1} parent=1 // pred_region
      _
    $region5: #{device_fwd.1} parent=1 // pred_fallthru
      _
    // Predicated region
    $region6: #{device_fwd.1} parent=1 // pred_check
      _
    $region7: #{device_fwd.1} parent=1 // pred_check_branch
      %23 = sbr.rel (0) target = $region9
    $region8: #{device_fwd.1} parent=1 // pred_region
      _
    $region9: #{device_fwd.1} parent=1 // pred_fallthru
      _
    // Predicated region
    $region10: #{device_fwd.1} parent=1 // pred_check
      _
    $region11: #{device_fwd.1} parent=1 // pred_check_branch
      %25 = sbr.rel (0) target = $region13
    $region12: #{device_fwd.1} parent=1 // pred_region
      _
    $region13: #{device_fwd.1} parent=1 // pred_fallthru
      _
    // Predicated region
    $region14: #{device_fwd.1} parent=1 // pred_check
      _
    $region15: #{device_fwd.1} parent=1 // pred_check_branch
      %27 = sbr.rel (0) target = $region17
    $region16: #{device_fwd.1} parent=1 // pred_region
      _
    $region17: #{device_fwd.1} parent=1 // pred_fallthru
      _
    // Predicated region
    $region18: #{device_fwd.1} parent=1 // pred_check
      _
    $region19: #{device_fwd.1} parent=1 // pred_check_branch
      %29 = sbr.rel (0) target = $region21
    $region20: #{device_fwd.1} parent=1 // pred_region
      _
    $region21: #{device_fwd.1} parent=1 // pred_fallthru
      _
    // Predicated region
    $region22: #{device_fwd.1} parent=1 // pred_check
      _
    $region23: #{device_fwd.1} parent=1 // pred_check_branch
      %31 = sbr.rel (0) target = $region25
    $region24: #{device_fwd.1} parent=1 // pred_region
      _
    $region25: #{device_fwd.1} parent=1 // pred_fallthru
      _
    // Predicated region
    $region26: #{device_fwd.1} parent=1 // pred_check
      _
    $region27: #{device_fwd.1} parent=1 // pred_check_branch
      %33 = sbr.rel (0) target = $region29
    $region28: #{device_fwd.1} parent=1 // pred_region
      _
    $region29: #{device_fwd.1} parent=1 // pred_fallthru
      _
    %s35 = sld [smem:[#allocation4]]
    %s36 = scalar_lea.vmem %s1, %s35
    %v37 = vld [vmem:[%s36] sm:$0x1]
    %38 = vst [vmem:[#allocation2] sm:$0x1] %v37
    %s39 = sld [smem:[#allocation4 + $0x1]]
    %s40 = scalar_lea.vmem %s1, %s39
    %v41 = vld [vmem:[%s40] sm:$0x1]
    %42 = vst [vmem:[#allocation2 + $0x1] sm:$0x1] %v41
    %s43 = sld [smem:[#allocation4 + $0x2]]
    %s44 = scalar_lea.vmem %s1, %s43
    %v45 = vld [vmem:[%s44] sm:$0x1]
    %46 = vst [vmem:[#allocation2 + $0x2] sm:$0x1] %v45
    %s47 = sld [smem:[#allocation4 + $0x3]]
    %s48 = scalar_lea.vmem %s1, %s47
    %v49 = vld [vmem:[%s48] sm:$0x1]
    %50 = vst [vmem:[#allocation2 + $0x3] sm:$0x1] %v49
    %s51 = sld [smem:[#allocation4 + $0x4]]
    %s52 = scalar_lea.vmem %s1, %s51
    %v53 = vld [vmem:[%s52] sm:$0x1]
    %54 = vst [vmem:[#allocation2 + $0x4] sm:$0x1] %v53
    %s55 = sld [smem:[#allocation4 + $0x5]]
    %s56 = scalar_lea.vmem %s1, %s55
    %v57 = vld [vmem:[%s56] sm:$0x1]
    %58 = vst [vmem:[#allocation2 + $0x5] sm:$0x1] %v57
    %s59 = sld [smem:[#allocation4 + $0x6]]
    %s60 = scalar_lea.vmem %s1, %s59
    %v61 = vld [vmem:[%s60] sm:$0x1]
    %62 = vst [vmem:[#allocation2 + $0x6] sm:$0x1] %v61
    %s63 = sld [smem:[#allocation4 + $0x7]]
    %s64 = scalar_lea.vmem %s1, %s63
    %v65 = vld [vmem:[%s64] sm:$0x1]
    %66 = vst [vmem:[#allocation2 + $0x7] sm:$0x1] %v65
    %v67 = vld [vmem:[#allocation2] sm:$0xff]
    %v68 = vld [vmem:[%s2] sm:$0xff]
    %v69 = vld [vmem:[%s2 + $0x8] sm:$0xff]
    %v70 = vld [vmem:[%s2 + $0x10] sm:$0xff]
    %v71 = vld [vmem:[%s2 + $0x18] sm:$0xff]
    %v72 = vld [vmem:[%s2 + $0x20] sm:$0xff]
    %v73 = vld [vmem:[%s2 + $0x28] sm:$0xff]
    %v74 = vld [vmem:[%s2 + $0x30] sm:$0xff]
    %v75 = vld [vmem:[%s2 + $0x38] sm:$0xff]
    %v76 = vld [vmem:[%s2 + $0x40] sm:$0xff]
    %v77 = vld [vmem:[%s2 + $0x48] sm:$0xff]
    %v78 = vld [vmem:[%s2 + $0x50] sm:$0xff]
    %v79 = vld [vmem:[%s2 + $0x58] sm:$0xff]
    %v80 = vld [vmem:[%s2 + $0x60] sm:$0xff]
    %v81 = vld [vmem:[%s2 + $0x68] sm:$0xff]
    %v82 = vld [vmem:[%s2 + $0x70] sm:$0xff]
    %v83 = vld [vmem:[%s2 + $0x78] sm:$0xff]
    %v84 = vld [vmem:[%s3] sm:$0x1]
    %v86 = vlaneseq
    %v87 = vshrl.u32 %v86, 7
    %v88 = vsub.s32 0, %v87
    %v89 = vrot.slane %v84, %v88
    %91 = vmatprep.subr.mxu0 0.0
    %92 = vmatpush1.msra.mxu0 %v68
    %93 = vmatprep.subr.mxu0 0.0
    %94 = vmatpush1.msra.mxu0 %v69
    %95 = vmatprep.subr.mxu0 0.0
    %96 = vmatpush1.msra.mxu0 %v70
    %97 = vmatprep.subr.mxu0 0.0
    %98 = vmatpush1.msra.mxu0 %v71
    %99 = vmatprep.subr.mxu0 0.0
    %100 = vmatpush1.msra.mxu0 %v72
    %101 = vmatprep.subr.mxu0 0.0
    %102 = vmatpush1.msra.mxu0 %v73
    %103 = vmatprep.subr.mxu0 0.0
    %104 = vmatpush1.msra.mxu0 %v74
    %105 = vmatprep.subr.mxu0 0.0
    %106 = vmatpush1.msra.mxu0 %v75
    %107 = vmatprep.subr.mxu0 0.0
    %108 = vmatpush1.msra.mxu0 %v76
    %109 = vmatprep.subr.mxu0 0.0
    %110 = vmatpush1.msra.mxu0 %v77
    %111 = vmatprep.subr.mxu0 0.0
    %112 = vmatpush1.msra.mxu0 %v78
    %113 = vmatprep.subr.mxu0 0.0
    %114 = vmatpush1.msra.mxu0 %v79
    %115 = vmatprep.subr.mxu0 0.0
    %116 = vmatpush1.msra.mxu0 %v80
    %117 = vmatprep.subr.mxu0 0.0
    %118 = vmatpush1.msra.mxu0 %v81
    %119 = vmatprep.subr.mxu0 0.0
    %120 = vmatpush1.msra.mxu0 %v82
    %121 = vmatprep.subr.mxu0 0.0
    %122 = vmatpush1.msra.mxu0 %v83
    %123 = vmatprep.subr.mxu0 0.0
    %124 = vmatpush1.msra.mxu0 0.0
    %125 = vmatprep.subr.mxu0 0.0
    %126 = vmatpush1.msra.mxu0 0.0
    %127 = vmatprep.subr.mxu0 0.0
    %128 = vmatpush1.msra.mxu0 0.0
    %129 = vmatprep.subr.mxu0 0.0
    %130 = vmatpush1.msra.mxu0 0.0
    %131 = vmatprep.subr.mxu0 0.0
    %132 = vmatpush1.msra.mxu0 0.0
    %133 = vmatprep.subr.mxu0 0.0
    %134 = vmatpush1.msra.mxu0 0.0
    %135 = vmatprep.subr.mxu0 0.0
    %136 = vmatpush1.msra.mxu0 0.0
    %137 = vmatprep.subr.mxu0 0.0
    %138 = vmatpush1.msra.mxu0 0.0
    %139 = vmatprep.subr.mxu0 0.0
    %140 = vmatpush1.msra.mxu0 0.0
    %141 = vmatprep.subr.mxu0 0.0
    %142 = vmatpush1.msra.mxu0 0.0
    %143 = vmatprep.subr.mxu0 0.0
    %144 = vmatpush1.msra.mxu0 0.0
    %145 = vmatprep.subr.mxu0 0.0
    %146 = vmatpush1.msra.mxu0 0.0
    %147 = vmatprep.subr.mxu0 0.0
    %148 = vmatpush1.msra.mxu0 0.0
    %149 = vmatprep.subr.mxu0 0.0
    %150 = vmatpush1.msra.mxu0 0.0
    %151 = vmatprep.subr.mxu0 0.0
    %152 = vmatpush1.msra.mxu0 0.0
    %153 = vmatprep.subr.mxu0 0.0
    %154 = vmatpush1.msra.mxu0 0.0
    %155 = vmatprep.mubr.f32.mxu0 0.0
    %156 = vmatmul.mubr.f32.gmra.mrb[0].mxu0 %v67
    %v157 = vpop.f32.mrb[0].mxu0
    %v158 = vadd.f32 %v89, %v157
    %v159 = vpop.f32.mrb[0].mxu0
    %160 = vdwg.mxu0
    %v161 = vmax.f32 %v158, 0.0
    %v162 = vld [vmem:[%s4] sm:$0xff]
    %v163 = vld [vmem:[%s4 + $0x8] sm:$0xff]
    %v164 = vld [vmem:[%s4 + $0x10] sm:$0xff]
    %v165 = vld [vmem:[%s4 + $0x18] sm:$0xff]
    %v166 = vld [vmem:[%s5] sm:$0x1]
    %v168 = vlaneseq
    %v169 = vshrl.u32 %v168, 7
    %v170 = vsub.s32 0, %v169
    %v171 = vrot.slane %v166, %v170
    %vm173 = vcmask 261120
    %v175 = vsel %vm173, %v161, 0
    %177 = vmatprep.subr.mxu0 0.0
    %178 = vmatpush1.msra.mxu0 %v162
    %179 = vmatprep.subr.mxu0 0.0
    %180 = vmatpush1.msra.mxu0 %v163
    %181 = vmatprep.subr.mxu0 0.0
    %182 = vmatpush1.msra.mxu0 %v164
    %183 = vmatprep.subr.mxu0 0.0
    %184 = vmatpush1.msra.mxu0 %v165
    %185 = vmatprep.subr.mxu0 0.0
    %186 = vmatpush1.msra.mxu0 0.0
    %187 = vmatprep.subr.mxu0 0.0
    %188 = vmatpush1.msra.mxu0 0.0
    %189 = vmatprep.subr.mxu0 0.0
    %190 = vmatpush1.msra.mxu0 0.0
    %191 = vmatprep.subr.mxu0 0.0
    %192 = vmatpush1.msra.mxu0 0.0
    %193 = vmatprep.subr.mxu0 0.0
    %194 = vmatpush1.msra.mxu0 0.0
    %195 = vmatprep.subr.mxu0 0.0
    %196 = vmatpush1.msra.mxu0 0.0
    %197 = vmatprep.subr.mxu0 0.0
    %198 = vmatpush1.msra.mxu0 0.0
    %199 = vmatprep.subr.mxu0 0.0
    %200 = vmatpush1.msra.mxu0 0.0
    %201 = vmatprep.subr.mxu0 0.0
    %202 = vmatpush1.msra.mxu0 0.0
    %203 = vmatprep.subr.mxu0 0.0
    %204 = vmatpush1.msra.mxu0 0.0
    %205 = vmatprep.subr.mxu0 0.0
    %206 = vmatpush1.msra.mxu0 0.0
    %207 = vmatprep.subr.mxu0 0.0
    %208 = vmatpush1.msra.mxu0 0.0
    %209 = vmatprep.subr.mxu0 0.0
    %210 = vmatpush1.msra.mxu0 0.0
    %211 = vmatprep.subr.mxu0 0.0
    %212 = vmatpush1.msra.mxu0 0.0
    %213 = vmatprep.subr.mxu0 0.0
    %214 = vmatpush1.msra.mxu0 0.0
    %215 = vmatprep.subr.mxu0 0.0
    %216 = vmatpush1.msra.mxu0 0.0
    %217 = vmatprep.subr.mxu0 0.0
    %218 = vmatpush1.msra.mxu0 0.0
    %219 = vmatprep.subr.mxu0 0.0
    %220 = vmatpush1.msra.mxu0 0.0
    %221 = vmatprep.subr.mxu0 0.0
    %222 = vmatpush1.msra.mxu0 0.0
    %223 = vmatprep.subr.mxu0 0.0
    %224 = vmatpush1.msra.mxu0 0.0
    %225 = vmatprep.subr.mxu0 0.0
    %226 = vmatpush1.msra.mxu0 0.0
    %227 = vmatprep.subr.mxu0 0.0
    %228 = vmatpush1.msra.mxu0 0.0
    %229 = vmatprep.subr.mxu0 0.0
    %230 = vmatpush1.msra.mxu0 0.0
    %231 = vmatprep.subr.mxu0 0.0
    %232 = vmatpush1.msra.mxu0 0.0
    %233 = vmatprep.subr.mxu0 0.0
    %234 = vmatpush1.msra.mxu0 0.0
    %235 = vmatprep.subr.mxu0 0.0
    %236 = vmatpush1.msra.mxu0 0.0
    %237 = vmatprep.subr.mxu0 0.0
    %238 = vmatpush1.msra.mxu0 0.0
    %239 = vmatprep.subr.mxu0 0.0
    %240 = vmatpush1.msra.mxu0 0.0
    %241 = vmatprep.mubr.f32.mxu0 0.0
    %242 = vmatmul.mubr.f32.gmra.mrb[0].mxu0 %v175
    %v243 = vpop.f32.mrb[0].mxu0
    %v244 = vadd.f32 %v171, %v243
    %v245 = vpop.f32.mrb[0].mxu0
    %246 = vdwg.mxu0
    %v247 = vpack.c.bf16 %v244, %v244
    %v248 = vld [vmem:[%s6] sm:$0xff]
    %v249 = vld [vmem:[%s6 + $0x8] sm:$0xff]
    %v250 = vld [vmem:[%s6 + $0x10] sm:$0xff]
    %v251 = vld [vmem:[%s6 + $0x18] sm:$0xff]
    %v252 = vld [vmem:[%s6 + $0x20] sm:$0xff]
    %v253 = vld [vmem:[%s6 + $0x28] sm:$0xff]
    %v254 = vld [vmem:[%s6 + $0x30] sm:$0xff]
    %v255 = vld [vmem:[%s6 + $0x38] sm:$0xff]
    %v256 = vld [vmem:[%s6 + $0x40] sm:$0xff]
    %v257 = vld [vmem:[%s6 + $0x48] sm:$0xff]
    %v258 = vld [vmem:[%s6 + $0x50] sm:$0xff]
    %v259 = vld [vmem:[%s6 + $0x58] sm:$0xff]
    %v260 = vld [vmem:[%s6 + $0x60] sm:$0xff]
    %v261 = vld [vmem:[%s6 + $0x68] sm:$0xff]
    %v262 = vld [vmem:[%s6 + $0x70] sm:$0xff]
    %v263 = vld [vmem:[%s6 + $0x78] sm:$0xff]
    %v264 = vld [vmem:[%s7] sm:$0xff]
    %v266 = vlaneseq
    %v267 = vshrl.u32 %v266, 7
    %v268 = vsub.s32 0, %v267
    %v269 = vrot.slane %v264, %v268
    %v270 = vlaneseq
    %v271 = vshrl.u32 %v270, 7
    %v272 = vsub.s32 1, %v271
    %v273 = vrot.slane %v264, %v272
    %v274 = vlaneseq
    %v275 = vshrl.u32 %v274, 7
    %v276 = vsub.s32 2, %v275
    %v277 = vrot.slane %v264, %v276
    %v278 = vlaneseq
    %v279 = vshrl.u32 %v278, 7
    %v280 = vsub.s32 3, %v279
    %v281 = vrot.slane %v264, %v280
    %v282 = vlaneseq
    %v283 = vshrl.u32 %v282, 7
    %v284 = vsub.s32 4, %v283
    %v285 = vrot.slane %v264, %v284
    %v286 = vlaneseq
    %v287 = vshrl.u32 %v286, 7
    %v288 = vsub.s32 5, %v287
    %v289 = vrot.slane %v264, %v288
    %v290 = vlaneseq
    %v291 = vshrl.u32 %v290, 7
    %v292 = vsub.s32 6, %v291
    %v293 = vrot.slane %v264, %v292
    %v294 = vlaneseq
    %v295 = vshrl.u32 %v294, 7
    %v296 = vsub.s32 7, %v295
    %v297 = vrot.slane %v264, %v296
    %v322 = vunpack.c.l.b16 %v248
    %v323 = vunpack.c.h.b16 %v248
    %v324 = vunpack.c.l.b16 %v249
    %v325 = vunpack.c.h.b16 %v249
    %v326 = vunpack.c.l.b16 %v250
    %v327 = vunpack.c.h.b16 %v250
    %v328 = vunpack.c.l.b16 %v251
    %v329 = vunpack.c.h.b16 %v251
    %v330 = vunpack.c.l.b16 %v252
    %v331 = vunpack.c.h.b16 %v252
    %v332 = vunpack.c.l.b16 %v253
    %v333 = vunpack.c.h.b16 %v253
    %v334 = vunpack.c.l.b16 %v254
    %v335 = vunpack.c.h.b16 %v254
    %v336 = vunpack.c.l.b16 %v255
    %v337 = vunpack.c.h.b16 %v255
    %v338 = vunpack.c.l.b16 %v256
    %v339 = vunpack.c.h.b16 %v256
    %v340 = vunpack.c.l.b16 %v257
    %v341 = vunpack.c.h.b16 %v257
    %v342 = vunpack.c.l.b16 %v258
    %v343 = vunpack.c.h.b16 %v258
    %v344 = vunpack.c.l.b16 %v259
    %v345 = vunpack.c.h.b16 %v259
    %v346 = vunpack.c.l.b16 %v260
    %v347 = vunpack.c.h.b16 %v260
    %v348 = vunpack.c.l.b16 %v261
    %v349 = vunpack.c.h.b16 %v261
    %v350 = vunpack.c.l.b16 %v262
    %v351 = vunpack.c.h.b16 %v262
    %v352 = vunpack.c.l.b16 %v263
    %v353 = vunpack.c.h.b16 %v263
    %v354 = vpack.c.b16 %v330, %v322
    %v355 = vpack.c.b16 %v331, %v323
    %v356 = vpack.c.b16 %v332, %v324
    %v357 = vpack.c.b16 %v333, %v325
    %v358 = vpack.c.b16 %v334, %v326
    %v359 = vpack.c.b16 %v335, %v327
    %v360 = vpack.c.b16 %v336, %v328
    %v361 = vpack.c.b16 %v337, %v329
    %v362 = vpack.c.b16 %v346, %v338
    %v363 = vpack.c.b16 %v347, %v339
    %v364 = vpack.c.b16 %v348, %v340
    %v365 = vpack.c.b16 %v349, %v341
    %v366 = vpack.c.b16 %v350, %v342
    %v367 = vpack.c.b16 %v351, %v343
    %v368 = vpack.c.b16 %v352, %v344
    %v369 = vpack.c.b16 %v353, %v345
    %v387 = vsel %vm173, %v247, 0
    %389 = vmatprep.subr.bf16.mxu0 %v355
    %390 = vmatpush1.bf16.msra.mxu0 %v354
    %391 = vmatprep.subr.bf16.mxu0 %v363
    %392 = vmatpush1.bf16.msra.mxu0 %v362
    %393 = vmatprep.subr.bf16.mxu0 0
    %394 = vmatpush1.bf16.msra.mxu0 0
    %395 = vmatprep.subr.bf16.mxu0 0
    %396 = vmatpush1.bf16.msra.mxu0 0
    %397 = vmatprep.subr.bf16.mxu0 0
    %398 = vmatpush1.bf16.msra.mxu0 0
    %399 = vmatprep.subr.bf16.mxu0 0
    %400 = vmatpush1.bf16.msra.mxu0 0
    %401 = vmatprep.subr.bf16.mxu0 0
    %402 = vmatpush1.bf16.msra.mxu0 0
    %403 = vmatprep.subr.bf16.mxu0 0
    %404 = vmatpush1.bf16.msra.mxu0 0
    %405 = vmatprep.subr.bf16.mxu0 0
    %406 = vmatpush1.bf16.msra.mxu0 0
    %407 = vmatprep.subr.bf16.mxu0 0
    %408 = vmatpush1.bf16.msra.mxu0 0
    %409 = vmatprep.subr.bf16.mxu0 0
    %410 = vmatpush1.bf16.msra.mxu0 0
    %411 = vmatprep.subr.bf16.mxu0 0
    %412 = vmatpush1.bf16.msra.mxu0 0
    %413 = vmatprep.subr.bf16.mxu0 0
    %414 = vmatpush1.bf16.msra.mxu0 0
    %415 = vmatprep.subr.bf16.mxu0 0
    %416 = vmatpush1.bf16.msra.mxu0 0
    %417 = vmatprep.subr.bf16.mxu0 0
    %418 = vmatpush1.bf16.msra.mxu0 0
    %419 = vmatprep.subr.bf16.mxu0 0
    %420 = vmatpush1.bf16.msra.mxu0 0
    %421 = vmatprep.mubr.bf16.mxu0 0
    %422 = vmatmul.mubr.bf16.gmra.mrb[0].mxu0 %v387
    %v423 = vpop.f32.mrb[0].mxu0
    %v424 = vadd.f32 %v269, %v423
    %v425 = vpop.f32.mrb[0].mxu0
    %v426 = vadd.f32 %v273, %v425
    %v427 = vpop.f32.mrb[0].mxu0
    %v428 = vpop.f32.mrb[0].mxu0
    %429 = vdwg.mxu0
    %430 = vmatprep.subr.bf16.mxu0 %v357
    %431 = vmatpush1.bf16.msra.mxu0 %v356
    %432 = vmatprep.subr.bf16.mxu0 %v365
    %433 = vmatpush1.bf16.msra.mxu0 %v364
    %434 = vmatprep.subr.bf16.mxu0 0
    %435 = vmatpush1.bf16.msra.mxu0 0
    %436 = vmatprep.subr.bf16.mxu0 0
    %437 = vmatpush1.bf16.msra.mxu0 0
    %438 = vmatprep.subr.bf16.mxu0 0
    %439 = vmatpush1.bf16.msra.mxu0 0
    %440 = vmatprep.subr.bf16.mxu0 0
    %441 = vmatpush1.bf16.msra.mxu0 0
    %442 = vmatprep.subr.bf16.mxu0 0
    %443 = vmatpush1.bf16.msra.mxu0 0
    %444 = vmatprep.subr.bf16.mxu0 0
    %445 = vmatpush1.bf16.msra.mxu0 0
    %446 = vmatprep.subr.bf16.mxu0 0
    %447 = vmatpush1.bf16.msra.mxu0 0
    %448 = vmatprep.subr.bf16.mxu0 0
    %449 = vmatpush1.bf16.msra.mxu0 0
    %450 = vmatprep.subr.bf16.mxu0 0
    %451 = vmatpush1.bf16.msra.mxu0 0
    %452 = vmatprep.subr.bf16.mxu0 0
    %453 = vmatpush1.bf16.msra.mxu0 0
    %454 = vmatprep.subr.bf16.mxu0 0
    %455 = vmatpush1.bf16.msra.mxu0 0
    %456 = vmatprep.subr.bf16.mxu0 0
    %457 = vmatpush1.bf16.msra.mxu0 0
    %458 = vmatprep.subr.bf16.mxu0 0
    %459 = vmatpush1.bf16.msra.mxu0 0
    %460 = vmatprep.subr.bf16.mxu0 0
    %461 = vmatpush1.bf16.msra.mxu0 0
    %462 = vmatprep.mubr.bf16.mxu0 0
    %463 = vmatmul.mubr.bf16.gmra.mrb[0].mxu0 %v387
    %v464 = vpop.f32.mrb[0].mxu0
    %v465 = vadd.f32 %v277, %v464
    %v466 = vpop.f32.mrb[0].mxu0
    %v467 = vadd.f32 %v281, %v466
    %v468 = vpop.f32.mrb[0].mxu0
    %v469 = vpop.f32.mrb[0].mxu0
    %470 = vdwg.mxu0
    %471 = vmatprep.subr.bf16.mxu0 %v359
    %472 = vmatpush1.bf16.msra.mxu0 %v358
    %473 = vmatprep.subr.bf16.mxu0 %v367
    %474 = vmatpush1.bf16.msra.mxu0 %v366
    %475 = vmatprep.subr.bf16.mxu0 0
    %476 = vmatpush1.bf16.msra.mxu0 0
    %477 = vmatprep.subr.bf16.mxu0 0
    %478 = vmatpush1.bf16.msra.mxu0 0
    %479 = vmatprep.subr.bf16.mxu0 0
    %480 = vmatpush1.bf16.msra.mxu0 0
    %481 = vmatprep.subr.bf16.mxu0 0
    %482 = vmatpush1.bf16.msra.mxu0 0
    %483 = vmatprep.subr.bf16.mxu0 0
    %484 = vmatpush1.bf16.msra.mxu0 0
    %485 = vmatprep.subr.bf16.mxu0 0
    %486 = vmatpush1.bf16.msra.mxu0 0
    %487 = vmatprep.subr.bf16.mxu0 0
    %488 = vmatpush1.bf16.msra.mxu0 0
    %489 = vmatprep.subr.bf16.mxu0 0
    %490 = vmatpush1.bf16.msra.mxu0 0
    %491 = vmatprep.subr.bf16.mxu0 0
    %492 = vmatpush1.bf16.msra.mxu0 0
    %493 = vmatprep.subr.bf16.mxu0 0
    %494 = vmatpush1.bf16.msra.mxu0 0
    %495 = vmatprep.subr.bf16.mxu0 0
    %496 = vmatpush1.bf16.msra.mxu0 0
    %497 = vmatprep.subr.bf16.mxu0 0
    %498 = vmatpush1.bf16.msra.mxu0 0
    %499 = vmatprep.subr.bf16.mxu0 0
    %500 = vmatpush1.bf16.msra.mxu0 0
    %501 = vmatprep.subr.bf16.mxu0 0
    %502 = vmatpush1.bf16.msra.mxu0 0
    %503 = vmatprep.mubr.bf16.mxu0 0
    %504 = vmatmul.mubr.bf16.gmra.mrb[0].mxu0 %v387
    %v505 = vpop.f32.mrb[0].mxu0
    %v506 = vadd.f32 %v285, %v505
    %v507 = vpop.f32.mrb[0].mxu0
    %v508 = vadd.f32 %v289, %v507
    %v509 = vpop.f32.mrb[0].mxu0
    %v510 = vpop.f32.mrb[0].mxu0
    %511 = vdwg.mxu0
    %512 = vmatprep.subr.bf16.mxu0 %v361
    %513 = vmatpush1.bf16.msra.mxu0 %v360
    %514 = vmatprep.subr.bf16.mxu0 %v369
    %515 = vmatpush1.bf16.msra.mxu0 %v368
    %516 = vmatprep.subr.bf16.mxu0 0
    %517 = vmatpush1.bf16.msra.mxu0 0
    %518 = vmatprep.subr.bf16.mxu0 0
    %519 = vmatpush1.bf16.msra.mxu0 0
    %520 = vmatprep.subr.bf16.mxu0 0
    %521 = vmatpush1.bf16.msra.mxu0 0
    %522 = vmatprep.subr.bf16.mxu0 0
    %523 = vmatpush1.bf16.msra.mxu0 0
    %524 = vmatprep.subr.bf16.mxu0 0
    %525 = vmatpush1.bf16.msra.mxu0 0
    %526 = vmatprep.subr.bf16.mxu0 0
    %527 = vmatpush1.bf16.msra.mxu0 0
    %528 = vmatprep.subr.bf16.mxu0 0
    %529 = vmatpush1.bf16.msra.mxu0 0
    %530 = vmatprep.subr.bf16.mxu0 0
    %531 = vmatpush1.bf16.msra.mxu0 0
    %532 = vmatprep.subr.bf16.mxu0 0
    %533 = vmatpush1.bf16.msra.mxu0 0
    %534 = vmatprep.subr.bf16.mxu0 0
    %535 = vmatpush1.bf16.msra.mxu0 0
    %536 = vmatprep.subr.bf16.mxu0 0
    %537 = vmatpush1.bf16.msra.mxu0 0
    %538 = vmatprep.subr.bf16.mxu0 0
    %539 = vmatpush1.bf16.msra.mxu0 0
    %540 = vmatprep.subr.bf16.mxu0 0
    %541 = vmatpush1.bf16.msra.mxu0 0
    %542 = vmatprep.subr.bf16.mxu0 0
    %543 = vmatpush1.bf16.msra.mxu0 0
    %544 = vmatprep.mubr.bf16.mxu0 0
    %545 = vmatmul.mubr.bf16.gmra.mrb[0].mxu0 %v387
    %v546 = vpop.f32.mrb[0].mxu0
    %v547 = vadd.f32 %v293, %v546
    %v548 = vpop.f32.mrb[0].mxu0
    %v549 = vadd.f32 %v297, %v548
    %v550 = vpop.f32.mrb[0].mxu0
    %v551 = vpop.f32.mrb[0].mxu0
    %552 = vdwg.mxu0
    %553 = vst [vmem:[#allocation5] sm:$0xff] %v424
    %554 = vst [vmem:[#allocation5 + $0x8] sm:$0xff] %v426
    %555 = vst [vmem:[#allocation5 + $0x10] sm:$0xff] %v465
    %556 = vst [vmem:[#allocation5 + $0x18] sm:$0xff] %v467
    %557 = vst [vmem:[#allocation5 + $0x20] sm:$0xff] %v506
    %558 = vst [vmem:[#allocation5 + $0x28] sm:$0xff] %v508
    %559 = vst [vmem:[#allocation5 + $0x30] sm:$0xff] %v547
    %560 = vst [vmem:[#allocation5 + $0x38] sm:$0xff] %v549
    // Predicated region
    $region30: #{device_fwd.1} parent=1 // pred_check
      _
    $region31: #{device_fwd.1} parent=1 // pred_check_branch
      %562 = sbr.rel (0) target = $region33
    $region32: #{device_fwd.1} parent=1 // pred_region
      %s564 = ssub.s32 1024, 1024
      %565 = vsyncadd [#allocation6], %s564
      %s567 = sshll.u32 [#allocation5], 4
      %s568 = int_to_ptr.vmem [resolvable:$true] %s567
      %570 = dma.vmem_to_hbm [thread:$0]  %s568, 1024, %s8, [#allocation6]
    $region33: #{device_fwd.1} parent=1 // pred_fallthru
      _
    // Predicated region
    $region34: #{device_fwd.1} parent=1 // pred_check
      _
    $region35: #{device_fwd.1} parent=1 // pred_check_branch
      %572 = sbr.rel (0) target = $region37
    $region36: #{device_fwd.1} parent=1 // pred_region
      %573 = dma.done [#allocation6], 1024
    $region37: #{device_fwd.1} parent=1 // pred_fallthru
      _
    %574 = vsyncpa [#allocation6], 1

</llo_original>
